<compile_context>
chip_gen: v6e
topology: v6e:2x2x1
jax: 0.10.0
libtpu: 0.0.40
codegen_flags: <defaults>
</compile_context>

<pallas_src>
import functools

import jax
import jax.numpy as jnp
from jax.experimental import pallas as pl
from jax.experimental.pallas import tpu as pltpu


def _critic_kernel(x_ref, w1_ref, b1_ref, w2_ref, b2_ref, w3_ref, b3_ref, o_ref):
    cd = w1_ref.dtype  # compute/epilogue dtype (bf16 by default, f32 optional)

    # fc1: (H, f_in) @ (f_in, tile_m) -> (H, tile_m); f32 accumulation on MXU,
    # bias + ReLU in the compute dtype (bf16 VPU on v6e/v7x).
    h1 = jnp.dot(w1_ref[...], x_ref[...], preferred_element_type=jnp.float32)
    h1 = jnp.maximum(h1.astype(cd) + b1_ref[...], 0)

    # fc2: (H, H) @ (H, tile_m) -> (H, tile_m).
    h2 = jnp.dot(w2_ref[...], h1, preferred_element_type=jnp.float32)
    h2 = jnp.maximum(h2.astype(cd) + b2_ref[...], 0)

    # fc3: (1, H) @ (H, tile_m) -> (1, tile_m).  Lane-dense result, stored with
    # unmasked full-lane vst (no XLU reduce, no relayout).
    y = jnp.dot(w3_ref[...], h2, preferred_element_type=jnp.float32) + b3_ref[...]
    o_ref[...] = y.astype(o_ref.dtype)


def _round_up(x, m):
    return (x + m - 1) // m * m


def _resident(shape):
    # Whole-array block; same block index for every tile (stays VMEM-resident).
    return pl.BlockSpec(shape, lambda i: (0,) * len(shape))


@functools.partial(jax.jit, static_argnames=("max_tile_m",))
def critic_forward(state, action, params, *, max_tile_m=8192):
    """Replicates Critic.forward. state: (B, S, n_state), action: (B, S, n_action)."""
    # The PyTorch module unsqueezes 1-D inputs to 2-D, but cat(dim=2) would then
    # fail; promote to 3-D so the op is well defined.
    if state.ndim == 1:
        state = state[None, None, :]
    if action.ndim == 1:
        action = action[None, None, :]

    w1, b1, w2, b2, w3, b3 = params   # torch layout: w1 (H, f_in), w2 (H, H), w3 (1, H)
    cd = w1.dtype
    n_hidden = w1.shape[0]
    n_state = state.shape[-1]
    n_action = action.shape[-1]
    f_in = n_state + n_action

    B, S = state.shape[0], state.shape[1]
    M = B * S

    # Feature-major input (f_in, M): concat + cast + transpose fuse into one
    # XLA copy (the cast pass was already paid for in the previous version).
    x_t = jnp.concatenate(
        [state.reshape(M, n_state), action.reshape(M, n_action)], axis=-1
    ).astype(cd).T

    # Tile the M (lane) axis: aim for >= 4 tiles (2 per v7x TensorCore) when M
    # is big enough, 128-lane-aligned balanced tiles, padding bounded by a tile.
    target_tiles = max(4, pl.cdiv(M, max_tile_m))
    tile_m = min(max_tile_m, _round_up(pl.cdiv(M, target_tiles), 128))
    m_pad = _round_up(M, tile_m)
    if m_pad != M:
        x_t = jnp.pad(x_t, ((0, 0), (0, m_pad - M)))
    num_tiles = m_pad // tile_m

    # Biases in the compute dtype for the epilogue (f32 kept for the fc3 add).
    b1c = b1.astype(cd)
    b2c = b2.astype(cd)

    out = pl.pallas_call(
        _critic_kernel,
        out_shape=jax.ShapeDtypeStruct((1, m_pad), jnp.float32),
        grid_spec=pltpu.PrefetchScalarGridSpec(
            num_scalar_prefetch=0,
            grid=(num_tiles,),
            in_specs=[
                pl.BlockSpec((f_in, tile_m), lambda i: (0, i)),   # x_T tile (lane-dense)
                _resident((n_hidden, f_in)),                      # fc1.weight
                _resident((n_hidden, 1)),                         # fc1.bias (column)
                _resident((n_hidden, n_hidden)),                  # fc2.weight
                _resident((n_hidden, 1)),                         # fc2.bias (column)
                _resident((1, n_hidden)),                         # fc3.weight (row)
                _resident((1, 1)),                                # fc3.bias
            ],
            out_specs=pl.BlockSpec((1, tile_m), lambda i: (0, i)),  # lane-dense output
        ),
        compiler_params=pltpu.CompilerParams(
            dimension_semantics=("parallel",),      # megacore sharding on v7x
            vmem_limit_bytes=32 * 1024 * 1024,      # footprint is only a few MiB
        ),
    )(x_t, w1, b1c, w2, b2c, w3, b3)

    return out[0, :M].reshape(B, S, 1)


def init_critic_params(key, n_state, n_action, n_hidden=64, dtype=jnp.bfloat16):
    """torch.nn.Linear-style init (uniform +/- 1/sqrt(fan_in)), torch (out, in) layout.

    Weights in `dtype` (bf16 default feeds the MXU directly); biases kept f32
    and cast to the compute dtype at call time.  Bias columns are (H, 1) so they
    broadcast along the lane (row) axis of the feature-major kernel.
    """
    k1, k2, k3, k4, k5, k6 = jax.random.split(key, 6)
    f_in = n_state + n_action

    def u(k, shape, fan_in):
        bound = 1.0 / jnp.sqrt(jnp.float32(fan_in))
        return jax.random.uniform(k, shape, jnp.float32, -bound, bound)

    w1 = u(k1, (n_hidden, f_in), f_in).astype(dtype)        # fc1.weight
    b1 = u(k2, (n_hidden, 1), f_in)                         # fc1.bias
    w2 = u(k3, (n_hidden, n_hidden), n_hidden).astype(dtype)  # fc2.weight
    b2 = u(k4, (n_hidden, 1), n_hidden)                     # fc2.bias
    w3 = u(k5, (1, n_hidden), n_hidden).astype(dtype)       # fc3.weight
    b3 = u(k6, (1, 1), n_hidden)                            # fc3.bias
    return (w1, b1, w2, b2, w3, b3)


def critic_reference(state, action, params):
    """Pure-JAX reference doing the same math (and the same dtype rounding)."""
    w1, b1, w2, b2, w3, b3 = params
    cd = w1.dtype
    if state.ndim == 1:
        state = state[None, None, :]
    if action.ndim == 1:
        action = action[None, None, :]
    x = jnp.concatenate([state, action], axis=-1).astype(cd)
    h1 = jnp.dot(x, w1.T, preferred_element_type=jnp.float32).astype(cd)
    h1 = jnp.maximum(h1 + b1[:, 0].astype(cd), 0)
    h2 = jnp.dot(h1, w2.T, preferred_element_type=jnp.float32).astype(cd)
    h2 = jnp.maximum(h2 + b2[:, 0].astype(cd), 0)
    return jnp.dot(h2, w3.T, preferred_element_type=jnp.float32) + b3[:, 0]


if __name__ == "__main__":
    key = jax.random.PRNGKey(0)
    k_params, k_state, k_action = jax.random.split(key, 3)

    # Small shapes consistent with the module: (batch, seq, features).
    B, S = 2, 8
    n_state, n_action, n_hidden = 6, 2, 32

    state = jax.random.normal(k_state, (B, S, n_state), jnp.float32)
    action = jax.random.normal(k_action, (B, S, n_action), jnp.float32)

    # 1) Full-f32 path: matches the PyTorch math (up to reassociation).
    params_f32 = init_critic_params(k_params, n_state, n_action, n_hidden,
                                    dtype=jnp.float32)
    out_f32 = jax.block_until_ready(critic_forward(state, action, params_f32))
    ref_f32 = critic_reference(state, action, params_f32)
    assert out_f32.shape == (B, S, 1), out_f32.shape
    assert jnp.allclose(out_f32, ref_f32, atol=1e-3, rtol=1e-3), "f32 mismatch"

    # 2) Default perf config (bf16 MXU inputs + bf16 epilogue, f32 accumulate):
    #    checked against a reference applying the same rounding.
    params_bf16 = init_critic_params(k_params, n_state, n_action, n_hidden,
                                     dtype=jnp.bfloat16)
    out_bf16 = jax.block_until_ready(critic_forward(state, action, params_bf16))
    ref_bf16 = critic_reference(state, action, params_bf16)
    assert out_bf16.shape == (B, S, 1), out_bf16.shape
    assert jnp.allclose(out_bf16, ref_bf16, atol=2e-2, rtol=2e-2), "bf16 mismatch"

    print("KERNEL_OK")
</pallas_src>

<mosaic_0001>
module attributes {stable_mosaic.version = 11 : i64} {
  func.func @_critic_kernel(%arg0: i32, %arg1: memref<8x128xf32, #tpu.memory_space<vmem>>, %arg2: memref<32x8xf32, #tpu.memory_space<vmem>>, %arg3: memref<32x1xf32, #tpu.memory_space<vmem>>, %arg4: memref<32x32xf32, #tpu.memory_space<vmem>>, %arg5: memref<32x1xf32, #tpu.memory_space<vmem>>, %arg6: memref<1x32xf32, #tpu.memory_space<vmem>>, %arg7: memref<1x1xf32, #tpu.memory_space<vmem>>, %arg8: memref<1x128xf32, #tpu.memory_space<vmem>>) attributes {dimension_semantics = [#tpu.dimension_semantics<parallel>], iteration_bounds = array<i64: 1>, scalar_prefetch = 0 : i64, scratch_operands = 0 : i64, tpu.core_type = #tpu.core_type<tc>, window_params = [{transform_indices = @transform_0, window_bounds = array<i64: 8, 128>}, {pipeline_mode = #tpu.pipeline_mode<synchronous>, transform_indices = @transform_1, window_bounds = array<i64: 32, 8>}, {pipeline_mode = #tpu.pipeline_mode<synchronous>, transform_indices = @transform_2, window_bounds = array<i64: 32, 1>}, {pipeline_mode = #tpu.pipeline_mode<synchronous>, transform_indices = @transform_3, window_bounds = array<i64: 32, 32>}, {pipeline_mode = #tpu.pipeline_mode<synchronous>, transform_indices = @transform_4, window_bounds = array<i64: 32, 1>}, {pipeline_mode = #tpu.pipeline_mode<synchronous>, transform_indices = @transform_5, window_bounds = array<i64: 1, 32>}, {pipeline_mode = #tpu.pipeline_mode<synchronous>, transform_indices = @transform_6, window_bounds = array<i64: 1, 1>}, {transform_indices = @transform_7, window_bounds = array<i64: 1, 128>}]} {
    %c0 = arith.constant 0 : index
    %c0_0 = arith.constant 0 : index
    %0 = vector.load %arg2[%c0, %c0_0] : memref<32x8xf32, #tpu.memory_space<vmem>>, vector<32x8xf32>
    %c0_1 = arith.constant 0 : index
    %c0_2 = arith.constant 0 : index
    %1 = vector.load %arg1[%c0_1, %c0_2] : memref<8x128xf32, #tpu.memory_space<vmem>>, vector<8x128xf32>
    %cst = arith.constant dense<0.000000e+00> : vector<32x128xf32>
    %2 = tpu.matmul %0, %1, %cst {dimension_numbers = #tpu.dot_dimension_numbers<[1], [0], [0], [1], [0, 0, 1, 1], [], []>} : vector<32x8xf32>, vector<8x128xf32>, vector<32x128xf32> -> vector<32x128xf32>
    %c0_3 = arith.constant 0 : index
    %c0_4 = arith.constant 0 : index
    %3 = vector.load %arg3[%c0_3, %c0_4] : memref<32x1xf32, #tpu.memory_space<vmem>>, vector<32x1xf32>
    %4 = vector.broadcast %3 : vector<32x1xf32> to vector<32x128xf32>
    %5 = arith.addf %2, %4 : vector<32x128xf32>
    %cst_5 = arith.constant 0.000000e+00 : f32
    %6 = vector.broadcast %cst_5 : f32 to vector<32x128xf32>
    %7 = arith.maximumf %5, %6 : vector<32x128xf32>
    %c0_6 = arith.constant 0 : index
    %c0_7 = arith.constant 0 : index
    %8 = vector.load %arg4[%c0_6, %c0_7] : memref<32x32xf32, #tpu.memory_space<vmem>>, vector<32x32xf32>
    %cst_8 = arith.constant dense<0.000000e+00> : vector<32x128xf32>
    %9 = tpu.matmul %8, %7, %cst_8 {dimension_numbers = #tpu.dot_dimension_numbers<[1], [0], [0], [1], [0, 0, 1, 1], [], []>} : vector<32x32xf32>, vector<32x128xf32>, vector<32x128xf32> -> vector<32x128xf32>
    %c0_9 = arith.constant 0 : index
    %c0_10 = arith.constant 0 : index
    %10 = vector.load %arg5[%c0_9, %c0_10] : memref<32x1xf32, #tpu.memory_space<vmem>>, vector<32x1xf32>
    %11 = vector.broadcast %10 : vector<32x1xf32> to vector<32x128xf32>
    %12 = arith.addf %9, %11 : vector<32x128xf32>
    %cst_11 = arith.constant 0.000000e+00 : f32
    %13 = vector.broadcast %cst_11 : f32 to vector<32x128xf32>
    %14 = arith.maximumf %12, %13 : vector<32x128xf32>
    %c0_12 = arith.constant 0 : index
    %c0_13 = arith.constant 0 : index
    %15 = vector.load %arg6[%c0_12, %c0_13] : memref<1x32xf32, #tpu.memory_space<vmem>>, vector<1x32xf32>
    %cst_14 = arith.constant dense<0.000000e+00> : vector<1x128xf32>
    %16 = tpu.matmul %15, %14, %cst_14 {dimension_numbers = #tpu.dot_dimension_numbers<[1], [0], [0], [1], [0, 0, 1, 1], [], []>} : vector<1x32xf32>, vector<32x128xf32>, vector<1x128xf32> -> vector<1x128xf32>
    %c0_15 = arith.constant 0 : index
    %c0_16 = arith.constant 0 : index
    %17 = vector.load %arg7[%c0_15, %c0_16] : memref<1x1xf32, #tpu.memory_space<vmem>>, vector<1x1xf32>
    %18 = vector.broadcast %17 : vector<1x1xf32> to vector<1x128xf32>
    %19 = arith.addf %16, %18 : vector<1x128xf32>
    %c0_17 = arith.constant 0 : index
    %c0_18 = arith.constant 0 : index
    %20 = vector.load %arg8[%c0_17, %c0_18] : memref<1x128xf32, #tpu.memory_space<vmem>>, vector<1x128xf32>
    tpu.vector_store %arg8[%c0_17, %c0_18], %19 {strides = array<i32>} : memref<1x128xf32, #tpu.memory_space<vmem>>, vector<1x128xf32>,
    return
  }
  func.func @transform_0(%arg0: i32) -> (i32, i32) {
    %c0_i32 = arith.constant 0 : i32
    %c0_i32_0 = arith.constant 0 : i32
    return %c0_i32, %arg0 : i32, i32
  }
  func.func @transform_1(%arg0: i32) -> (i32, i32) {
    %c0_i32 = arith.constant 0 : i32
    %c0_i32_0 = arith.constant 0 : i32
    %c0_i32_1 = arith.constant 0 : i32
    return %c0_i32, %c0_i32_0 : i32, i32
  }
  func.func @transform_2(%arg0: i32) -> (i32, i32) {
    %c0_i32 = arith.constant 0 : i32
    %c0_i32_0 = arith.constant 0 : i32
    %c0_i32_1 = arith.constant 0 : i32
    return %c0_i32, %c0_i32_0 : i32, i32
  }
  func.func @transform_3(%arg0: i32) -> (i32, i32) {
    %c0_i32 = arith.constant 0 : i32
    %c0_i32_0 = arith.constant 0 : i32
    %c0_i32_1 = arith.constant 0 : i32
    return %c0_i32, %c0_i32_0 : i32, i32
  }
  func.func @transform_4(%arg0: i32) -> (i32, i32) {
    %c0_i32 = arith.constant 0 : i32
    %c0_i32_0 = arith.constant 0 : i32
    %c0_i32_1 = arith.constant 0 : i32
    return %c0_i32, %c0_i32_0 : i32, i32
  }
  func.func @transform_5(%arg0: i32) -> (i32, i32) {
    %c0_i32 = arith.constant 0 : i32
    %c0_i32_0 = arith.constant 0 : i32
    %c0_i32_1 = arith.constant 0 : i32
    return %c0_i32, %c0_i32_0 : i32, i32
  }
  func.func @transform_6(%arg0: i32) -> (i32, i32) {
    %c0_i32 = arith.constant 0 : i32
    %c0_i32_0 = arith.constant 0 : i32
    %c0_i32_1 = arith.constant 0 : i32
    return %c0_i32, %c0_i32_0 : i32, i32
  }
  func.func @transform_7(%arg0: i32) -> (i32, i32) {
    %c0_i32 = arith.constant 0 : i32
    %c0_i32_0 = arith.constant 0 : i32
    return %c0_i32, %arg0 : i32, i32
  }
}

</mosaic_0001>

<llo_original>
// kernel: squeeze.1
$region0: #{squeeze.1}
  %s0 = inlined_call_operand.vmem [shape: f32[16], index: 0, kind: input, shape index: {}]
  %s1 = inlined_call_operand.hbm [shape: f32[2,8,1], index: 1, kind: output, shape index: {}]
  $region1: #{squeeze.1} parent=0
    #allocation0 [shape = 'u8[1024]{0}', space=vmem, size = 0x400, scoped, tag = 'operand span for operand 1']
    #allocation1 [shape = 's32[1]{0}', space=sflag, size = 0x4, scoped, tag = 'scoped memory for squeeze.1']
    #allocation2 [shape = 'u8[4096]{0}', space=vmem, size = 0x1000, scoped, tag = 'scoped mem for output reshape']
    #allocation3 [shape = 'u8[4096]{0}', space=vmem, size = 0x1000, scoped, tag = 'scoped mem for input reshape']
    %2 = vsyncpa [#allocation1], 0
    %s4 = sshll.u32 1, 1
    %s5 = ssub.s32 %s4, 1
    %v6 = vld [vmem:[%s0] sm:%s5]
    %7 = vst [vmem:[#allocation3] sm:%s5] %v6
    %v8 = vld [vmem:[#allocation3] sm:$0x1]
    %vm9 = vcmask 64512
    %10 = vst.msk [vmem:[#allocation2] sm:$0x1] %vm9, %v8
    %v11 = vld [vmem:[#allocation3] sm:$0x1]
    %12 = vrot.lane.b32.xlu0 %v11, 120
    %v13 = vpop.permute.xlu0 %12
    %vm14 = vcmask 64512
    %s15 = scalar_lea.vmem [#allocation2], 1
    %16 = vst.msk [vmem:[%s15] sm:$0x1] %vm14, %v13
    %s18 = sshll.u32 1, 2
    %s19 = ssub.s32 %s18, 1
    %v21 = vld [vmem:[#allocation2] sm:%s19]
    %s22 = sshll.u32 1, 2
    %s23 = ssub.s32 %s22, 1
    %24 = vst [vmem:[#allocation0] sm:%s23] %v21
    %s26 = ssub.s32 32, 32
    %27 = vsyncadd [#allocation1], %s26
    %s29 = sshll.u32 [#allocation0], 4
    %s30 = int_to_ptr.vmem [resolvable:$true] %s29
    %32 = dma.vmem_to_hbm [thread:$0]  %s30, 32, %s1, [#allocation1]
    %33 = dma.done [#allocation1], 32
    %34 = vsyncpa [#allocation1], 1

// kernel: critic_forward.1
$region0: #{critic_forward.1}
  #allocation0 [shape = 'u32[]', space=smem, size = 0x4, offset = 0x4, fixed_abs, tag = 'smem constant byte address 0x4 - core index']
  #allocation1 [shape = 'u32[144,128]{1,0:T(1,128)}', space=vmem, size = 0x12000, scoped, tag = 'internal scratch']
  #allocation2 [shape = 'f32[1,1]{1,0:T(1,128)S(1)}', space=vmem, size = 0x200, scoped, tag = 'scoped memory for critic_forward.1']
  %s0 = inlined_call_operand.vmem [shape: f32[8,128], index: 0, kind: input, shape index: {}]
  %s1 = inlined_call_operand.vmem [shape: f32[32,8], index: 1, kind: input, shape index: {}]
  %s2 = inlined_call_operand.vmem [shape: f32[32,1], index: 2, kind: input, shape index: {}]
  %s3 = inlined_call_operand.vmem [shape: f32[32,32], index: 3, kind: input, shape index: {}]
  %s4 = inlined_call_operand.vmem [shape: f32[32,1], index: 4, kind: input, shape index: {}]
  %s5 = inlined_call_operand.vmem [shape: f32[1,32], index: 5, kind: input, shape index: {}]
  %s6 = inlined_call_operand.<no memory space> [shape: f32[1,1], index: 6, kind: input, shape index: {}]
  %s7 = inlined_call_operand.vmem [shape: f32[1,128], index: 7, kind: output, shape index: {}]
  %s8 = sld [smem:[#allocation0]]
  $region38: #{critic_forward.1} parent=0
    _
  %s10 = ssub.s32 1, %s8
  %s11 = scalar_select 0, %s10, %s8
  %v12 = vstv %s6
  %13 = vst [vmem:[#allocation2] sm:$0x1] %v12
  // Predicated region
  $region2: #{critic_forward.1} parent=0 // pred_check
    _
  $region3: #{critic_forward.1} parent=0 // pred_check_branch
    %15 = sbr.rel (0) target = $region5
  $region4: #{critic_forward.1} parent=0 // pred_region
    _
  $region5: #{critic_forward.1} parent=0 // pred_fallthru
    _
  // Predicated region
  $region6: #{critic_forward.1} parent=0 // pred_check
    _
  $region7: #{critic_forward.1} parent=0 // pred_check_branch
    %17 = sbr.rel (0) target = $region9
  $region8: #{critic_forward.1} parent=0 // pred_region
    _
  $region9: #{critic_forward.1} parent=0 // pred_fallthru
    _
  // Predicated region
  $region10: #{critic_forward.1} parent=0 // pred_check
    _
  $region11: #{critic_forward.1} parent=0 // pred_check_branch
    %19 = sbr.rel (0) target = $region13
  $region12: #{critic_forward.1} parent=0 // pred_region
    _
  $region13: #{critic_forward.1} parent=0 // pred_fallthru
    _
  // Predicated region
  $region14: #{critic_forward.1} parent=0 // pred_check
    _
  $region15: #{critic_forward.1} parent=0 // pred_check_branch
    %21 = sbr.rel (0) target = $region17
  $region16: #{critic_forward.1} parent=0 // pred_region
    _
  $region17: #{critic_forward.1} parent=0 // pred_fallthru
    _
  // Predicated region
  $region18: #{critic_forward.1} parent=0 // pred_check
    _
  $region19: #{critic_forward.1} parent=0 // pred_check_branch
    %23 = sbr.rel (0) target = $region21
  $region20: #{critic_forward.1} parent=0 // pred_region
    _
  $region21: #{critic_forward.1} parent=0 // pred_fallthru
    _
  // Predicated region
  $region22: #{critic_forward.1} parent=0 // pred_check
    _
  $region23: #{critic_forward.1} parent=0 // pred_check_branch
    %25 = sbr.rel (0) target = $region25
  $region24: #{critic_forward.1} parent=0 // pred_region
    _
  $region25: #{critic_forward.1} parent=0 // pred_fallthru
    _
  // Predicated region
  $region26: #{critic_forward.1} parent=0 // pred_check
    _
  $region27: #{critic_forward.1} parent=0 // pred_check_branch
    %27 = sbr.rel (0) target = $region29
  $region28: #{critic_forward.1} parent=0 // pred_region
    _
  $region29: #{critic_forward.1} parent=0 // pred_fallthru
    _
  %v28 = vld [vmem:[%s1] sm:$0xff]
  %v29 = vld [vmem:[%s1 + $0x8] sm:$0xff]
  %v30 = vld [vmem:[%s1 + $0x10] sm:$0xff]
  %v31 = vld [vmem:[%s1 + $0x18] sm:$0xff]
  %v32 = vld [vmem:[%s0] sm:$0xff]
  %v33 = vld [vmem:[%s2] sm:$0xff]
  %v34 = vld [vmem:[%s2 + $0x8] sm:$0xff]
  %v35 = vld [vmem:[%s2 + $0x10] sm:$0xff]
  %v36 = vld [vmem:[%s2 + $0x18] sm:$0xff]
  %38 = vset.pattern.permute.xlu0 0
  %39 = vperm.xlu0 %38, %v33
  %v40 = vpop.permute.xlu0 %39
  %43 = vset.pattern.permute.xlu0 0
  %44 = vperm.xlu0 %43, %v34
  %v45 = vpop.permute.xlu0 %44
  %48 = vset.pattern.permute.xlu0 0
  %49 = vperm.xlu0 %48, %v35
  %v50 = vpop.permute.xlu0 %49
  %53 = vset.pattern.permute.xlu0 0
  %54 = vperm.xlu0 %53, %v36
  %v55 = vpop.permute.xlu0 %54
  %vm57 = vcmask 64512
  %v59 = vsel %vm57, %v28, 0
  %v62 = vsel %vm57, %v29, 0
  %v65 = vsel %vm57, %v30, 0
  %v68 = vsel %vm57, %v31, 0
  %70 = vmatprep.subr.mxu0 0.0
  %71 = vmatpush1.msra.mxu0 0.0
  %72 = vmatprep.subr.mxu0 0.0
  %73 = vmatpush1.msra.mxu0 0.0
  %74 = vmatprep.subr.mxu0 0.0
  %75 = vmatpush1.msra.mxu0 0.0
  %76 = vmatprep.subr.mxu0 0.0
  %77 = vmatpush1.msra.mxu0 0.0
  %78 = vmatprep.subr.mxu0 0.0
  %79 = vmatpush1.msra.mxu0 0.0
  %80 = vmatprep.subr.mxu0 0.0
  %81 = vmatpush1.msra.mxu0 0.0
  %82 = vmatprep.subr.mxu0 0.0
  %83 = vmatpush1.msra.mxu0 0.0
  %84 = vmatprep.subr.mxu0 0.0
  %85 = vmatpush1.msra.mxu0 0.0
  %86 = vmatprep.subr.mxu0 0.0
  %87 = vmatpush1.msra.mxu0 0.0
  %88 = vmatprep.subr.mxu0 0.0
  %89 = vmatpush1.msra.mxu0 0.0
  %90 = vmatprep.subr.mxu0 0.0
  %91 = vmatpush1.msra.mxu0 0.0
  %92 = vmatprep.subr.mxu0 0.0
  %93 = vmatpush1.msra.mxu0 0.0
  %94 = vmatprep.subr.mxu0 0.0
  %95 = vmatpush1.msra.mxu0 0.0
  %96 = vmatprep.subr.mxu0 0.0
  %97 = vmatpush1.msra.mxu0 0.0
  %98 = vmatprep.subr.mxu0 0.0
  %99 = vmatpush1.msra.mxu0 0.0
  %100 = vmatprep.subr.mxu0 0.0
  %101 = vmatpush1.msra.mxu0 %v32
  %102 = vmatprep.subr.mxu0 0.0
  %103 = vmatpush2.msra.mxu0 0.0
  %104 = vmatprep.subr.mxu0 0.0
  %105 = vmatpush2.msra.mxu0 0.0
  %106 = vmatprep.subr.mxu0 0.0
  %107 = vmatpush2.msra.mxu0 0.0
  %108 = vmatprep.subr.mxu0 0.0
  %109 = vmatpush2.msra.mxu0 0.0
  %110 = vmatprep.subr.mxu0 0.0
  %111 = vmatpush2.msra.mxu0 0.0
  %112 = vmatprep.subr.mxu0 0.0
  %113 = vmatpush2.msra.mxu0 0.0
  %114 = vmatprep.subr.mxu0 0.0
  %115 = vmatpush2.msra.mxu0 0.0
  %116 = vmatprep.subr.mxu0 0.0
  %117 = vmatpush2.msra.mxu0 0.0
  %118 = vmatprep.subr.mxu0 0.0
  %119 = vmatpush2.msra.mxu0 0.0
  %120 = vmatprep.subr.mxu0 0.0
  %121 = vmatpush2.msra.mxu0 0.0
  %122 = vmatprep.subr.mxu0 0.0
  %123 = vmatpush2.msra.mxu0 0.0
  %124 = vmatprep.subr.mxu0 0.0
  %125 = vmatpush2.msra.mxu0 0.0
  %126 = vmatprep.subr.mxu0 0.0
  %127 = vmatpush2.msra.mxu0 0.0
  %128 = vmatprep.subr.mxu0 0.0
  %129 = vmatpush2.msra.mxu0 0.0
  %130 = vmatprep.subr.mxu0 0.0
  %131 = vmatpush2.msra.mxu0 0.0
  %132 = vmatprep.subr.mxu0 0.0
  %133 = vmatpush2.msra.mxu0 0.0
  %134 = vmatprep.mubr.f32.mxu0 0.0
  %135 = vmatmul.mubr.f32.gmra.mxu0 %v59
  %v136 = vpop.f32.mrf.mxu0
  %v137 = vadd.f32 %v40, %v136
  %v138 = vpop.f32.mrf.mxu0
  %139 = vmatprep.mubr.f32.mxu0 0.0
  %140 = vmatmul.mubr.f32.gmra.mxu0 %v62
  %v141 = vpop.f32.mrf.mxu0
  %v142 = vadd.f32 %v45, %v141
  %v143 = vpop.f32.mrf.mxu0
  %144 = vmatprep.mubr.f32.mxu0 0.0
  %145 = vmatmul.mubr.f32.gmra.mxu0 %v65
  %v146 = vpop.f32.mrf.mxu0
  %v147 = vadd.f32 %v50, %v146
  %v148 = vpop.f32.mrf.mxu0
  %149 = vmatprep.mubr.f32.mxu0 0.0
  %150 = vmatmul.mubr.f32.gmra.mxu0 %v68
  %v151 = vpop.f32.mrf.mxu0
  %v152 = vadd.f32 %v55, %v151
  %v153 = vpop.f32.mrf.mxu0
  %154 = vdwg.mxu0
  %v155 = vmax.f32 %v137, 0.0
  %v156 = vmax.f32 %v142, 0.0
  %v157 = vmax.f32 %v147, 0.0
  %v158 = vmax.f32 %v152, 0.0
  %v159 = vld [vmem:[%s3] sm:$0xff]
  %v160 = vld [vmem:[%s3 + $0x8] sm:$0xff]
  %v161 = vld [vmem:[%s3 + $0x10] sm:$0xff]
  %v162 = vld [vmem:[%s3 + $0x18] sm:$0xff]
  %v163 = vld [vmem:[%s4] sm:$0xff]
  %v164 = vld [vmem:[%s4 + $0x8] sm:$0xff]
  %v165 = vld [vmem:[%s4 + $0x10] sm:$0xff]
  %v166 = vld [vmem:[%s4 + $0x18] sm:$0xff]
  %168 = vset.pattern.permute.xlu0 0
  %169 = vperm.xlu0 %168, %v163
  %v170 = vpop.permute.xlu0 %169
  %173 = vset.pattern.permute.xlu0 0
  %174 = vperm.xlu0 %173, %v164
  %v175 = vpop.permute.xlu0 %174
  %178 = vset.pattern.permute.xlu0 0
  %179 = vperm.xlu0 %178, %v165
  %v180 = vpop.permute.xlu0 %179
  %183 = vset.pattern.permute.xlu0 0
  %184 = vperm.xlu0 %183, %v166
  %v185 = vpop.permute.xlu0 %184
  %vm187 = vcmask 261120
  %v189 = vsel %vm187, %v159, 0
  %v192 = vsel %vm187, %v160, 0
  %v195 = vsel %vm187, %v161, 0
  %v198 = vsel %vm187, %v162, 0
  %200 = vmatprep.subr.mxu0 0.0
  %201 = vmatpush1.msra.mxu0 0.0
  %202 = vmatprep.subr.mxu0 0.0
  %203 = vmatpush1.msra.mxu0 0.0
  %204 = vmatprep.subr.mxu0 0.0
  %205 = vmatpush1.msra.mxu0 0.0
  %206 = vmatprep.subr.mxu0 0.0
  %207 = vmatpush1.msra.mxu0 0.0
  %208 = vmatprep.subr.mxu0 0.0
  %209 = vmatpush1.msra.mxu0 0.0
  %210 = vmatprep.subr.mxu0 0.0
  %211 = vmatpush1.msra.mxu0 0.0
  %212 = vmatprep.subr.mxu0 0.0
  %213 = vmatpush1.msra.mxu0 0.0
  %214 = vmatprep.subr.mxu0 0.0
  %215 = vmatpush1.msra.mxu0 0.0
  %216 = vmatprep.subr.mxu0 0.0
  %217 = vmatpush1.msra.mxu0 0.0
  %218 = vmatprep.subr.mxu0 0.0
  %219 = vmatpush1.msra.mxu0 0.0
  %220 = vmatprep.subr.mxu0 0.0
  %221 = vmatpush1.msra.mxu0 0.0
  %222 = vmatprep.subr.mxu0 0.0
  %223 = vmatpush1.msra.mxu0 0.0
  %224 = vmatprep.subr.mxu0 0.0
  %225 = vmatpush1.msra.mxu0 %v158
  %226 = vmatprep.subr.mxu0 0.0
  %227 = vmatpush1.msra.mxu0 %v157
  %228 = vmatprep.subr.mxu0 0.0
  %229 = vmatpush1.msra.mxu0 %v156
  %230 = vmatprep.subr.mxu0 0.0
  %231 = vmatpush1.msra.mxu0 %v155
  %232 = vmatprep.subr.mxu0 0.0
  %233 = vmatpush2.msra.mxu0 0.0
  %234 = vmatprep.subr.mxu0 0.0
  %235 = vmatpush2.msra.mxu0 0.0
  %236 = vmatprep.subr.mxu0 0.0
  %237 = vmatpush2.msra.mxu0 0.0
  %238 = vmatprep.subr.mxu0 0.0
  %239 = vmatpush2.msra.mxu0 0.0
  %240 = vmatprep.subr.mxu0 0.0
  %241 = vmatpush2.msra.mxu0 0.0
  %242 = vmatprep.subr.mxu0 0.0
  %243 = vmatpush2.msra.mxu0 0.0
  %244 = vmatprep.subr.mxu0 0.0
  %245 = vmatpush2.msra.mxu0 0.0
  %246 = vmatprep.subr.mxu0 0.0
  %247 = vmatpush2.msra.mxu0 0.0
  %248 = vmatprep.subr.mxu0 0.0
  %249 = vmatpush2.msra.mxu0 0.0
  %250 = vmatprep.subr.mxu0 0.0
  %251 = vmatpush2.msra.mxu0 0.0
  %252 = vmatprep.subr.mxu0 0.0
  %253 = vmatpush2.msra.mxu0 0.0
  %254 = vmatprep.subr.mxu0 0.0
  %255 = vmatpush2.msra.mxu0 0.0
  %256 = vmatprep.subr.mxu0 0.0
  %257 = vmatpush2.msra.mxu0 0.0
  %258 = vmatprep.subr.mxu0 0.0
  %259 = vmatpush2.msra.mxu0 0.0
  %260 = vmatprep.subr.mxu0 0.0
  %261 = vmatpush2.msra.mxu0 0.0
  %262 = vmatprep.subr.mxu0 0.0
  %263 = vmatpush2.msra.mxu0 0.0
  %264 = vmatprep.mubr.f32.mxu0 0.0
  %265 = vmatmul.mubr.f32.gmra.mxu0 %v189
  %v266 = vpop.f32.mrf.mxu0
  %v267 = vadd.f32 %v170, %v266
  %v268 = vpop.f32.mrf.mxu0
  %269 = vmatprep.mubr.f32.mxu0 0.0
  %270 = vmatmul.mubr.f32.gmra.mxu0 %v192
  %v271 = vpop.f32.mrf.mxu0
  %v272 = vadd.f32 %v175, %v271
  %v273 = vpop.f32.mrf.mxu0
  %274 = vmatprep.mubr.f32.mxu0 0.0
  %275 = vmatmul.mubr.f32.gmra.mxu0 %v195
  %v276 = vpop.f32.mrf.mxu0
  %v277 = vadd.f32 %v180, %v276
  %v278 = vpop.f32.mrf.mxu0
  %279 = vmatprep.mubr.f32.mxu0 0.0
  %280 = vmatmul.mubr.f32.gmra.mxu0 %v198
  %v281 = vpop.f32.mrf.mxu0
  %v282 = vadd.f32 %v185, %v281
  %v283 = vpop.f32.mrf.mxu0
  %284 = vdwg.mxu0
  %v285 = vmax.f32 %v267, 0.0
  %v286 = vmax.f32 %v272, 0.0
  %v287 = vmax.f32 %v277, 0.0
  %v288 = vmax.f32 %v282, 0.0
  %v289 = vld [vmem:[%s5] sm:$0x1]
  %v290 = vld [vmem:[#allocation2] sm:$0x1]
  %292 = vset.pattern.permute.xlu0 0
  %293 = vperm.xlu0 %292, %v290
  %v294 = vpop.permute.xlu0 %293
  %v296 = vlaneseq
  %v297 = vshrl.u32 %v296, 7
  %v298 = vsub.s32 0, %v297
  %v299 = vrot.slane %v294, %v298
  %v301 = vsel %vm187, %v289, 0
  %303 = vmatprep.subr.mxu0 0.0
  %304 = vmatpush1.msra.mxu0 0.0
  %305 = vmatprep.subr.mxu0 0.0
  %306 = vmatpush1.msra.mxu0 0.0
  %307 = vmatprep.subr.mxu0 0.0
  %308 = vmatpush1.msra.mxu0 0.0
  %309 = vmatprep.subr.mxu0 0.0
  %310 = vmatpush1.msra.mxu0 0.0
  %311 = vmatprep.subr.mxu0 0.0
  %312 = vmatpush1.msra.mxu0 0.0
  %313 = vmatprep.subr.mxu0 0.0
  %314 = vmatpush1.msra.mxu0 0.0
  %315 = vmatprep.subr.mxu0 0.0
  %316 = vmatpush1.msra.mxu0 0.0
  %317 = vmatprep.subr.mxu0 0.0
  %318 = vmatpush1.msra.mxu0 0.0
  %319 = vmatprep.subr.mxu0 0.0
  %320 = vmatpush1.msra.mxu0 0.0
  %321 = vmatprep.subr.mxu0 0.0
  %322 = vmatpush1.msra.mxu0 0.0
  %323 = vmatprep.subr.mxu0 0.0
  %324 = vmatpush1.msra.mxu0 0.0
  %325 = vmatprep.subr.mxu0 0.0
  %326 = vmatpush1.msra.mxu0 0.0
  %327 = vmatprep.subr.mxu0 0.0
  %328 = vmatpush1.msra.mxu0 %v288
  %329 = vmatprep.subr.mxu0 0.0
  %330 = vmatpush1.msra.mxu0 %v287
  %331 = vmatprep.subr.mxu0 0.0
  %332 = vmatpush1.msra.mxu0 %v286
  %333 = vmatprep.subr.mxu0 0.0
  %334 = vmatpush1.msra.mxu0 %v285
  %335 = vmatprep.subr.mxu0 0.0
  %336 = vmatpush2.msra.mxu0 0.0
  %337 = vmatprep.subr.mxu0 0.0
  %338 = vmatpush2.msra.mxu0 0.0
  %339 = vmatprep.subr.mxu0 0.0
  %340 = vmatpush2.msra.mxu0 0.0
  %341 = vmatprep.subr.mxu0 0.0
  %342 = vmatpush2.msra.mxu0 0.0
  %343 = vmatprep.subr.mxu0 0.0
  %344 = vmatpush2.msra.mxu0 0.0
  %345 = vmatprep.subr.mxu0 0.0
  %346 = vmatpush2.msra.mxu0 0.0
  %347 = vmatprep.subr.mxu0 0.0
  %348 = vmatpush2.msra.mxu0 0.0
  %349 = vmatprep.subr.mxu0 0.0
  %350 = vmatpush2.msra.mxu0 0.0
  %351 = vmatprep.subr.mxu0 0.0
  %352 = vmatpush2.msra.mxu0 0.0
  %353 = vmatprep.subr.mxu0 0.0
  %354 = vmatpush2.msra.mxu0 0.0
  %355 = vmatprep.subr.mxu0 0.0
  %356 = vmatpush2.msra.mxu0 0.0
  %357 = vmatprep.subr.mxu0 0.0
  %358 = vmatpush2.msra.mxu0 0.0
  %359 = vmatprep.subr.mxu0 0.0
  %360 = vmatpush2.msra.mxu0 0.0
  %361 = vmatprep.subr.mxu0 0.0
  %362 = vmatpush2.msra.mxu0 0.0
  %363 = vmatprep.subr.mxu0 0.0
  %364 = vmatpush2.msra.mxu0 0.0
  %365 = vmatprep.subr.mxu0 0.0
  %366 = vmatpush2.msra.mxu0 0.0
  %367 = vmatprep.mubr.f32.mxu0 0.0
  %368 = vmatmul.mubr.f32.gmra.mxu0 %v301
  %v369 = vpop.f32.mrf.mxu0
  %v370 = vadd.f32 %v299, %v369
  %v371 = vpop.f32.mrf.mxu0
  %372 = vdwg.mxu0
  %373 = vst [vmem:[%s7] sm:$0x1] %v370
  // Predicated region
  $region30: #{critic_forward.1} parent=0 // pred_check
    _
  $region31: #{critic_forward.1} parent=0 // pred_check_branch
    %375 = sbr.rel (0) target = $region33
  $region32: #{critic_forward.1} parent=0 // pred_region
    _
  $region33: #{critic_forward.1} parent=0 // pred_fallthru
    _
  // Predicated region
  $region34: #{critic_forward.1} parent=0 // pred_check
    _
  $region35: #{critic_forward.1} parent=0 // pred_check_branch
    %377 = sbr.rel (0) target = $region37
  $region36: #{critic_forward.1} parent=0 // pred_region
    _
  $region37: #{critic_forward.1} parent=0 // pred_fallthru
    _

</llo_original>
